<compile_context>
chip_gen: v5e
topology: v5e:2x2
jax: 0.10.0
libtpu: 0.0.40
codegen_flags: <defaults>
</compile_context>

<pallas_src>
from functools import partial

import jax
import jax.numpy as jnp
import numpy as np
from jax.experimental import pallas as pl
from jax.experimental.pallas import tpu as pltpu


# ----------------------------------------------------------------------------
# cached_conv-style "centered" padding: total = (k-1)*d + 1 - stride
# ----------------------------------------------------------------------------
def get_padding(kernel_size, stride=1, dilation=1):
    if kernel_size == 1:
        return (0, 0)
    p = (kernel_size - 1) * dilation + 1 - stride
    return (p // 2 + p % 2, p // 2)          # extra sample on the left


# ----------------------------------------------------------------------------
# Fused Pallas kernel: LeakyReLU -> dilated Conv1d -> LeakyReLU -> 1x1 Conv1d
# ----------------------------------------------------------------------------
def _dilated_unit_kernel(x_ref, w1_ref, b1_ref, w2_ref, b2_ref, o_ref, *,
                         kernel_size, dilation, pad_left, seq_len):
    """All refs are whole-array VMEM blocks.

    x_ref  : (C, N*L)     lane-dense, batch flattened onto the lane axis
    w1_ref : (K, C, C)    dilated-conv weight, w1_ref[k, o, i] = torch_w1[o, i, k]
    b1_ref : (C, 1)
    w2_ref : (C, C)       1x1-conv weight (O, I)
    b2_ref : (C, 1)
    o_ref  : (C, N*L)     lane-dense output (un-flattened in the wrapper)
    """
    C, NL = o_ref.shape
    L = seq_len

    # ---- LeakyReLU(0.2) #1 (VPU), kept in vregs -----------------------------
    x = x_ref[...]
    h = jnp.where(x >= 0.0, x, 0.2 * x)                       # (C, NL)

    # per-sample time index within each batch segment (for boundary masks)
    t_idx = jax.lax.broadcasted_iota(jnp.int32, (C, NL), 1) % L

    # ---- dilated conv: K rolled taps, accumulated on the MXU ----------------
    y = None
    for k in range(kernel_size):
        s = k * dilation - pad_left                           # static tap shift
        # tap[:, n*L + t] = h[:, n*L + t + s]  (value valid iff 0 <= t+s < L)
        tap = h if s == 0 else pltpu.roll(h, shift=(-s) % NL, axis=1)
        lo, hi = max(0, -s), min(L, L - s)
        if lo > 0 or hi < L:                                  # zero pad region
            tap = jnp.where((t_idx >= lo) & (t_idx < hi), tap, 0.0)
        contrib = jnp.dot(w1_ref[k], tap,
                          preferred_element_type=jnp.float32)  # (C, NL)
        y = contrib if y is None else y + contrib
    y = y + b1_ref[...]

    # ---- LeakyReLU(0.2) #2 ---------------------------------------------------
    y = jnp.where(y >= 0.0, y, 0.2 * y)

    # ---- 1x1 conv == plain matmul, single unmasked 128-lane store -----------
    z = jnp.dot(w2_ref[...], y,
                preferred_element_type=jnp.float32) + b2_ref[...]
    o_ref[...] = z.astype(o_ref.dtype)


# ----------------------------------------------------------------------------
# Parameter preparation (done ONCE, outside the hot path)
# ----------------------------------------------------------------------------
def prepare_params(w1_oik, b1, w2_oik, b2):
    """torch layouts: w1 (O, I, K), w2 (O, I, 1) -> kernel layouts."""
    w1_stack = jnp.transpose(w1_oik, (2, 0, 1))               # (K, O, I)
    w2f = w2_oik[:, :, 0]                                     # (O, I)
    return w1_stack, b1.reshape(-1, 1), w2f, b2.reshape(-1, 1)


# ----------------------------------------------------------------------------
# Jitted forward wrapper (single pallas_call, no grid)
# ----------------------------------------------------------------------------
@partial(jax.jit, static_argnames=("kernel_size", "dilation"))
def dilated_unit_forward(x_ncl, w1_stack, b1c, w2f, b2c, *, kernel_size, dilation):
    N, C, L = x_ncl.shape
    NL = N * L
    pad_l, _pad_r = get_padding(kernel_size, dilation=dilation)

    # lane-dense flatten (N, C, L) -> (C, N*L): XLA-side layout plumbing
    x_flat = jnp.transpose(x_ncl, (1, 0, 2)).reshape(C, NL)

    kernel = partial(_dilated_unit_kernel, kernel_size=kernel_size,
                     dilation=dilation, pad_left=pad_l, seq_len=L)

    flops = 2 * NL * C * C * (kernel_size + 1)
    bytes_accessed = 4 * (2 * C * NL + (kernel_size + 1) * C * C + 2 * C)

    z_flat = pl.pallas_call(
        kernel,
        out_shape=jax.ShapeDtypeStruct((C, NL), jnp.float32),
        in_specs=[pl.BlockSpec(memory_space=pltpu.MemorySpace.VMEM)] * 5,
        out_specs=pl.BlockSpec(memory_space=pltpu.MemorySpace.VMEM),
        cost_estimate=pl.CostEstimate(flops=flops, transcendentals=0,
                                      bytes_accessed=bytes_accessed),
    )(x_flat, w1_stack, b1c, w2f, b2c)

    # un-flatten back to PyTorch NCL: (C, N*L) -> (N, C, L)
    return jnp.transpose(z_flat.reshape(C, N, L), (1, 0, 2))


# ----------------------------------------------------------------------------
# Pure-JAX reference (torch semantics) for correctness checking
# ----------------------------------------------------------------------------
def dilated_unit_ref(x, w1, b1, w2, b2, dilation):
    kernel_size = w1.shape[-1]
    pad = get_padding(kernel_size, dilation=dilation)
    h = jnp.where(x >= 0, x, 0.2 * x)
    h = jax.lax.conv_general_dilated(
        h, w1, window_strides=(1,), padding=[pad], rhs_dilation=(dilation,),
        dimension_numbers=("NCH", "OIH", "NCH")) + b1[None, :, None]
    h = jnp.where(h >= 0, h, 0.2 * h)
    h = jax.lax.conv_general_dilated(
        h, w2, window_strides=(1,), padding=[(0, 0)],
        dimension_numbers=("NCH", "OIH", "NCH")) + b2[None, :, None]
    return h


# ----------------------------------------------------------------------------
if __name__ == "__main__":
    dim = 32             # DilatedUnit(dim=32, kernel_size=3, dilation=2)
    kernel_size = 3
    dilation = 2
    N, L = 2, 64

    key = jax.random.PRNGKey(0)
    k1, k2, k3, k4, kx = jax.random.split(key, 5)

    fan1 = dim * kernel_size
    w1 = jax.random.normal(k1, (dim, dim, kernel_size), jnp.float32) / np.sqrt(fan1)
    b1 = 0.05 * jax.random.normal(k2, (dim,), jnp.float32)
    w2 = jax.random.normal(k3, (dim, dim, 1), jnp.float32) / np.sqrt(dim)
    b2 = 0.05 * jax.random.normal(k4, (dim,), jnp.float32)

    x = jax.random.normal(kx, (N, dim, L), jnp.float32)      # torch NCL input

    w1s, b1c, w2f, b2c = prepare_params(w1, b1, w2, b2)

    y = dilated_unit_forward(x, w1s, b1c, w2f, b2c,
                             kernel_size=kernel_size, dilation=dilation)
    y = jax.block_until_ready(y)

    y_ref = dilated_unit_ref(x, w1, b1, w2, b2, dilation)

    assert y.shape == (N, dim, L), y.shape
    np.testing.assert_allclose(np.asarray(y), np.asarray(y_ref),
                               rtol=1e-3, atol=1e-3)
    print("KERNEL_OK")
</pallas_src>

<mosaic_0001>
module attributes {stable_mosaic.version = 11 : i64} {
  func.func @_dilated_unit_kernel(%arg0: memref<32x128xf32, #tpu.memory_space<vmem>>, %arg1: memref<3x32x32xf32, #tpu.memory_space<vmem>>, %arg2: memref<32x1xf32, #tpu.memory_space<vmem>>, %arg3: memref<32x32xf32, #tpu.memory_space<vmem>>, %arg4: memref<32x1xf32, #tpu.memory_space<vmem>>, %arg5: memref<32x128xf32, #tpu.memory_space<vmem>>) attributes {dimension_semantics = [], scalar_prefetch = 0 : i64, scratch_operands = 0 : i64, tpu.core_type = #tpu.core_type<tc>} {
    %c0 = arith.constant 0 : index
    %c0_0 = arith.constant 0 : index
    %0 = vector.load %arg0[%c0, %c0_0] : memref<32x128xf32, #tpu.memory_space<vmem>>, vector<32x128xf32>
    %cst = arith.constant 0.000000e+00 : f32
    %1 = vector.broadcast %cst : f32 to vector<32x128xf32>
    %2 = arith.cmpf oge, %0, %1 : vector<32x128xf32>
    %cst_1 = arith.constant 2.000000e-01 : f32
    %3 = vector.broadcast %cst_1 : f32 to vector<32x128xf32>
    %4 = arith.mulf %3, %0 : vector<32x128xf32>
    %5 = arith.select %2, %0, %4 : vector<32x128xi1>, vector<32x128xf32>
    %6 = tpu.iota {dimensions = array<i32: 1>} : vector<32x128xi32>
    %c64_i32 = arith.constant 64 : i32
    %c0_i32 = arith.constant 0 : i32
    %7 = arith.cmpi eq, %c64_i32, %c0_i32 : i32
    %c1_i32 = arith.constant 1 : i32
    %8 = arith.select %7, %c1_i32, %c64_i32 : i32
    %9 = vector.broadcast %8 : i32 to vector<32x128xi32>
    %10 = arith.remsi %6, %9 : vector<32x128xi32>
    %c0_i32_2 = arith.constant 0 : i32
    %11 = vector.broadcast %c0_i32_2 : i32 to vector<32x128xi32>
    %12 = arith.cmpi ne, %10, %11 : vector<32x128xi32>
    %c0_i32_3 = arith.constant 0 : i32
    %13 = vector.broadcast %c0_i32_3 : i32 to vector<32x128xi32>
    %14 = arith.cmpi slt, %10, %13 : vector<32x128xi32>
    %c0_i32_4 = arith.constant 0 : i32
    %15 = arith.cmpi slt, %8, %c0_i32_4 : i32
    %16 = vector.broadcast %15 : i1 to vector<32x128xi1>
    %17 = vector.broadcast %16 : vector<32x128xi1> to vector<32x128xi1>
    %18 = arith.xori %14, %17 : vector<32x128xi1>
    %19 = arith.andi %18, %12 : vector<32x128xi1>
    %20 = vector.broadcast %8 : i32 to vector<32x128xi32>
    %21 = arith.addi %10, %20 : vector<32x128xi32>
    %22 = arith.select %19, %21, %10 : vector<32x128xi1>, vector<32x128xi32>
    %c2_i32 = arith.constant 2 : i32
    %23 = tpu.dynamic_rotate %5 by %c2_i32 dim 1 : vector<32x128xf32>, i32 -> vector<32x128xf32>
    %c2_i32_5 = arith.constant 2 : i32
    %24 = vector.broadcast %c2_i32_5 : i32 to vector<32x128xi32>
    %25 = arith.cmpi sge, %22, %24 : vector<32x128xi32>
    %c64_i32_6 = arith.constant 64 : i32
    %26 = vector.broadcast %c64_i32_6 : i32 to vector<32x128xi32>
    %27 = arith.cmpi slt, %22, %26 : vector<32x128xi32>
    %28 = arith.andi %25, %27 : vector<32x128xi1>
    %cst_7 = arith.constant 0.000000e+00 : f32
    %29 = vector.broadcast %cst_7 : f32 to vector<32x128xf32>
    %30 = arith.select %28, %23, %29 : vector<32x128xi1>, vector<32x128xf32>
    %c0_8 = arith.constant 0 : index
    %c0_9 = arith.constant 0 : index
    %c0_10 = arith.constant 0 : index
    %31 = vector.load %arg1[%c0_8, %c0_9, %c0_10] : memref<3x32x32xf32, #tpu.memory_space<vmem>>, vector<1x32x32xf32>
    %32 = vector.shape_cast %31 : vector<1x32x32xf32> to vector<32x32xf32>
    %cst_11 = arith.constant dense<0.000000e+00> : vector<32x128xf32>
    %33 = tpu.matmul %32, %30, %cst_11 {dimension_numbers = #tpu.dot_dimension_numbers<[1], [0], [0], [1], [0, 0, 1, 1], [], []>} : vector<32x32xf32>, vector<32x128xf32>, vector<32x128xf32> -> vector<32x128xf32>
    %c1 = arith.constant 1 : index
    %c0_12 = arith.constant 0 : index
    %c0_13 = arith.constant 0 : index
    %34 = vector.load %arg1[%c1, %c0_12, %c0_13] : memref<3x32x32xf32, #tpu.memory_space<vmem>>, vector<1x32x32xf32>
    %35 = vector.shape_cast %34 : vector<1x32x32xf32> to vector<32x32xf32>
    %cst_14 = arith.constant dense<0.000000e+00> : vector<32x128xf32>
    %36 = tpu.matmul %35, %5, %cst_14 {dimension_numbers = #tpu.dot_dimension_numbers<[1], [0], [0], [1], [0, 0, 1, 1], [], []>} : vector<32x32xf32>, vector<32x128xf32>, vector<32x128xf32> -> vector<32x128xf32>
    %37 = arith.addf %33, %36 : vector<32x128xf32>
    %c126_i32 = arith.constant 126 : i32
    %38 = tpu.dynamic_rotate %5 by %c126_i32 dim 1 : vector<32x128xf32>, i32 -> vector<32x128xf32>
    %c0_i32_15 = arith.constant 0 : i32
    %39 = vector.broadcast %c0_i32_15 : i32 to vector<32x128xi32>
    %40 = arith.cmpi sge, %22, %39 : vector<32x128xi32>
    %c62_i32 = arith.constant 62 : i32
    %41 = vector.broadcast %c62_i32 : i32 to vector<32x128xi32>
    %42 = arith.cmpi slt, %22, %41 : vector<32x128xi32>
    %43 = arith.andi %40, %42 : vector<32x128xi1>
    %cst_16 = arith.constant 0.000000e+00 : f32
    %44 = vector.broadcast %cst_16 : f32 to vector<32x128xf32>
    %45 = arith.select %43, %38, %44 : vector<32x128xi1>, vector<32x128xf32>
    %c2 = arith.constant 2 : index
    %c0_17 = arith.constant 0 : index
    %c0_18 = arith.constant 0 : index
    %46 = vector.load %arg1[%c2, %c0_17, %c0_18] : memref<3x32x32xf32, #tpu.memory_space<vmem>>, vector<1x32x32xf32>
    %47 = vector.shape_cast %46 : vector<1x32x32xf32> to vector<32x32xf32>
    %cst_19 = arith.constant dense<0.000000e+00> : vector<32x128xf32>
    %48 = tpu.matmul %47, %45, %cst_19 {dimension_numbers = #tpu.dot_dimension_numbers<[1], [0], [0], [1], [0, 0, 1, 1], [], []>} : vector<32x32xf32>, vector<32x128xf32>, vector<32x128xf32> -> vector<32x128xf32>
    %49 = arith.addf %37, %48 : vector<32x128xf32>
    %c0_20 = arith.constant 0 : index
    %c0_21 = arith.constant 0 : index
    %50 = vector.load %arg2[%c0_20, %c0_21] : memref<32x1xf32, #tpu.memory_space<vmem>>, vector<32x1xf32>
    %51 = vector.broadcast %50 : vector<32x1xf32> to vector<32x128xf32>
    %52 = arith.addf %49, %51 : vector<32x128xf32>
    %cst_22 = arith.constant 0.000000e+00 : f32
    %53 = vector.broadcast %cst_22 : f32 to vector<32x128xf32>
    %54 = arith.cmpf oge, %52, %53 : vector<32x128xf32>
    %cst_23 = arith.constant 2.000000e-01 : f32
    %55 = vector.broadcast %cst_23 : f32 to vector<32x128xf32>
    %56 = arith.mulf %55, %52 : vector<32x128xf32>
    %57 = arith.select %54, %52, %56 : vector<32x128xi1>, vector<32x128xf32>
    %c0_24 = arith.constant 0 : index
    %c0_25 = arith.constant 0 : index
    %58 = vector.load %arg3[%c0_24, %c0_25] : memref<32x32xf32, #tpu.memory_space<vmem>>, vector<32x32xf32>
    %cst_26 = arith.constant dense<0.000000e+00> : vector<32x128xf32>
    %59 = tpu.matmul %58, %57, %cst_26 {dimension_numbers = #tpu.dot_dimension_numbers<[1], [0], [0], [1], [0, 0, 1, 1], [], []>} : vector<32x32xf32>, vector<32x128xf32>, vector<32x128xf32> -> vector<32x128xf32>
    %c0_27 = arith.constant 0 : index
    %c0_28 = arith.constant 0 : index
    %60 = vector.load %arg4[%c0_27, %c0_28] : memref<32x1xf32, #tpu.memory_space<vmem>>, vector<32x1xf32>
    %61 = vector.broadcast %60 : vector<32x1xf32> to vector<32x128xf32>
    %62 = arith.addf %59, %61 : vector<32x128xf32>
    %c0_29 = arith.constant 0 : index
    %c0_30 = arith.constant 0 : index
    %63 = vector.load %arg5[%c0_29, %c0_30] : memref<32x128xf32, #tpu.memory_space<vmem>>, vector<32x128xf32>
    tpu.vector_store %arg5[%c0_29, %c0_30], %62 {strides = array<i32>} : memref<32x128xf32, #tpu.memory_space<vmem>>, vector<32x128xf32>,
    return
  }
}

</mosaic_0001>

<llo_original>
// kernel: dilated_unit_forward.1
$region0: #{dilated_unit_forward.1}
  #allocation0 [shape = 'u32[]', space=smem, size = 0x4, offset = 0x4, fixed_abs, tag = 'smem constant byte address 0x4 - core index']
  #allocation1 [shape = 'u32[72,128]{1,0:T(1,128)}', space=vmem, size = 0x9000, scoped, tag = 'internal scratch']
  %s0 = inlined_call_operand.vmem [shape: f32[32,128], index: 0, kind: input, shape index: {}]
  %s1 = inlined_call_operand.vmem [shape: f32[3,32,32], index: 1, kind: input, shape index: {}]
  %s2 = inlined_call_operand.vmem [shape: f32[32,1], index: 2, kind: input, shape index: {}]
  %s3 = inlined_call_operand.vmem [shape: f32[32,32], index: 3, kind: input, shape index: {}]
  %s4 = inlined_call_operand.vmem [shape: f32[32,1], index: 4, kind: input, shape index: {}]
  %s5 = inlined_call_operand.vmem [shape: f32[32,128], index: 5, kind: output, shape index: {}]
  %s6 = sld [smem:[#allocation0]]
  $region30: #{dilated_unit_forward.1} parent=0
    _
  %s8 = ssub.s32 1, %s6
  %s9 = scalar_select 0, %s8, %s6
  // Predicated region
  $region2: #{dilated_unit_forward.1} parent=0 // pred_check
    _
  $region3: #{dilated_unit_forward.1} parent=0 // pred_check_branch
    %11 = sbr.rel (0) target = $region5
  $region4: #{dilated_unit_forward.1} parent=0 // pred_region
    _
  $region5: #{dilated_unit_forward.1} parent=0 // pred_fallthru
    _
  // Predicated region
  $region6: #{dilated_unit_forward.1} parent=0 // pred_check
    _
  $region7: #{dilated_unit_forward.1} parent=0 // pred_check_branch
    %13 = sbr.rel (0) target = $region9
  $region8: #{dilated_unit_forward.1} parent=0 // pred_region
    _
  $region9: #{dilated_unit_forward.1} parent=0 // pred_fallthru
    _
  // Predicated region
  $region10: #{dilated_unit_forward.1} parent=0 // pred_check
    _
  $region11: #{dilated_unit_forward.1} parent=0 // pred_check_branch
    %15 = sbr.rel (0) target = $region13
  $region12: #{dilated_unit_forward.1} parent=0 // pred_region
    _
  $region13: #{dilated_unit_forward.1} parent=0 // pred_fallthru
    _
  // Predicated region
  $region14: #{dilated_unit_forward.1} parent=0 // pred_check
    _
  $region15: #{dilated_unit_forward.1} parent=0 // pred_check_branch
    %17 = sbr.rel (0) target = $region17
  $region16: #{dilated_unit_forward.1} parent=0 // pred_region
    _
  $region17: #{dilated_unit_forward.1} parent=0 // pred_fallthru
    _
  // Predicated region
  $region18: #{dilated_unit_forward.1} parent=0 // pred_check
    _
  $region19: #{dilated_unit_forward.1} parent=0 // pred_check_branch
    %19 = sbr.rel (0) target = $region21
  $region20: #{dilated_unit_forward.1} parent=0 // pred_region
    _
  $region21: #{dilated_unit_forward.1} parent=0 // pred_fallthru
    _
  %v20 = vld [vmem:[%s0] sm:$0xff]
  %v21 = vld [vmem:[%s0 + $0x8] sm:$0xff]
  %v22 = vld [vmem:[%s0 + $0x10] sm:$0xff]
  %v23 = vld [vmem:[%s0 + $0x18] sm:$0xff]
  %vm24 = vcmp.ge.f32.partialorder %v20, 0.0
  %vm25 = vcmp.ge.f32.partialorder %v21, 0.0
  %vm26 = vcmp.ge.f32.partialorder %v22, 0.0
  %vm27 = vcmp.ge.f32.partialorder %v23, 0.0
  %v28 = vmul.f32 %v20, 0.2
  %v29 = vmul.f32 %v21, 0.2
  %v30 = vmul.f32 %v22, 0.2
  %v31 = vmul.f32 %v23, 0.2
  %v32 = vsel %vm24, %v20, %v28
  %v33 = vsel %vm25, %v21, %v29
  %v34 = vsel %vm26, %v22, %v30
  %v35 = vsel %vm27, %v23, %v31
  %v36 = vlaneseq
  %v37 = vand.u32 %v36, 127
  %vm38 = vcmp.lt.s32.totalorder %v37, 0
  %v39 = vsub.s32 0, %v37
  %v40 = vsel %vm38, %v39, %v37
  %v41 = vshrl.u32 %v40, 6
  %v42 = vand.u32 %v40, 63
  %v43 = vsub.s32 0, %v42
  %v44 = vsel %vm38, %v43, %v42
  %vm45 = vcmp.ne.s32.totalorder %v44, 0
  %vm46 = vcmp.lt.s32.totalorder %v44, 0
  %vm47 = vmand %vm46, %vm45
  %v48 = vadd.s32 %v44, 64
  %v49 = vsel %vm47, %v48, %v44
  %50 = vrot.lane.b32.xlu0 %v32, 2
  %v51 = vpop.permute.xlu0 %50
  %52 = vrot.lane.b32.xlu0 %v33, 2
  %v53 = vpop.permute.xlu0 %52
  %54 = vrot.lane.b32.xlu0 %v34, 2
  %v55 = vpop.permute.xlu0 %54
  %56 = vrot.lane.b32.xlu0 %v35, 2
  %v57 = vpop.permute.xlu0 %56
  %vm58 = vcmp.ge.s32.totalorder %v49, 2
  %vm59 = vcmp.lt.s32.totalorder %v49, 64
  %vm60 = vmand %vm58, %vm59
  %v61 = vsel %vm60, %v51, 0.0
  %v62 = vsel %vm60, %v53, 0.0
  %v63 = vsel %vm60, %v55, 0.0
  %v64 = vsel %vm60, %v57, 0.0
  %v65 = vld [vmem:[%s1] sm:$0xff]
  %v66 = vld [vmem:[%s1 + $0x8] sm:$0xff]
  %v67 = vld [vmem:[%s1 + $0x10] sm:$0xff]
  %v68 = vld [vmem:[%s1 + $0x18] sm:$0xff]
  %s69 = scalar_lea.vmem %s1, 32
  %v70 = vld [vmem:[%s69] sm:$0xff]
  %v71 = vld [vmem:[%s69 + $0x8] sm:$0xff]
  %v72 = vld [vmem:[%s69 + $0x10] sm:$0xff]
  %v73 = vld [vmem:[%s69 + $0x18] sm:$0xff]
  %vm74 = vcmask 261120
  %v76 = vsel %vm74, %v70, 0
  %v79 = vsel %vm74, %v71, 0
  %v82 = vsel %vm74, %v72, 0
  %v85 = vsel %vm74, %v73, 0
  %87 = vmatpush.msra.mxu0 0.0
  %88 = vmatpush.msra.mxu0 0.0
  %89 = vmatpush.msra.mxu0 0.0
  %90 = vmatpush.msra.mxu0 0.0
  %91 = vmatpush.msra.mxu0 0.0
  %92 = vmatpush.msra.mxu0 0.0
  %93 = vmatpush.msra.mxu0 0.0
  %94 = vmatpush.msra.mxu0 0.0
  %95 = vmatpush.msra.mxu0 0.0
  %96 = vmatpush.msra.mxu0 0.0
  %97 = vmatpush.msra.mxu0 0.0
  %98 = vmatpush.msra.mxu0 0.0
  %99 = vmatpush.msra.mxu0 %v35
  %100 = vmatpush.msra.mxu0 %v34
  %101 = vmatpush.msra.mxu0 %v33
  %102 = vmatpush.msra.mxu0 %v32
  %103 = vmatmul.f32.gmra.mxu0 %v76
  %v104 = vpop.f32.mrf.mxu0
  %v105 = vadd.f32 0.0, %v104
  %106 = vmatmul.f32.gmra.mxu0 %v79
  %v107 = vpop.f32.mrf.mxu0
  %v108 = vadd.f32 0.0, %v107
  %109 = vmatmul.f32.gmra.mxu0 %v82
  %v110 = vpop.f32.mrf.mxu0
  %v111 = vadd.f32 0.0, %v110
  %112 = vmatmul.f32.gmra.mxu0 %v85
  %v113 = vpop.f32.mrf.mxu0
  %v114 = vadd.f32 0.0, %v113
  %115 = vdwg.mxu0
  %v117 = vsel %vm74, %v65, 0
  %v120 = vsel %vm74, %v66, 0
  %v123 = vsel %vm74, %v67, 0
  %v126 = vsel %vm74, %v68, 0
  %128 = vmatpush.msra.mxu0 0.0
  %129 = vmatpush.msra.mxu0 0.0
  %130 = vmatpush.msra.mxu0 0.0
  %131 = vmatpush.msra.mxu0 0.0
  %132 = vmatpush.msra.mxu0 0.0
  %133 = vmatpush.msra.mxu0 0.0
  %134 = vmatpush.msra.mxu0 0.0
  %135 = vmatpush.msra.mxu0 0.0
  %136 = vmatpush.msra.mxu0 0.0
  %137 = vmatpush.msra.mxu0 0.0
  %138 = vmatpush.msra.mxu0 0.0
  %139 = vmatpush.msra.mxu0 0.0
  %140 = vmatpush.msra.mxu0 %v64
  %141 = vmatpush.msra.mxu0 %v63
  %142 = vmatpush.msra.mxu0 %v62
  %143 = vmatpush.msra.mxu0 %v61
  %144 = vmatmul.f32.gmra.mxu0 %v117
  %v145 = vpop.f32.mrf.mxu0
  %v146 = vadd.f32 %v105, %v145
  %147 = vmatmul.f32.gmra.mxu0 %v120
  %v148 = vpop.f32.mrf.mxu0
  %v149 = vadd.f32 %v108, %v148
  %150 = vmatmul.f32.gmra.mxu0 %v123
  %v151 = vpop.f32.mrf.mxu0
  %v152 = vadd.f32 %v111, %v151
  %153 = vmatmul.f32.gmra.mxu0 %v126
  %v154 = vpop.f32.mrf.mxu0
  %v155 = vadd.f32 %v114, %v154
  %156 = vdwg.mxu0
  %157 = vrot.lane.b32.xlu0 %v32, 126
  %v158 = vpop.permute.xlu0 %157
  %159 = vrot.lane.b32.xlu0 %v33, 126
  %v160 = vpop.permute.xlu0 %159
  %161 = vrot.lane.b32.xlu0 %v34, 126
  %v162 = vpop.permute.xlu0 %161
  %163 = vrot.lane.b32.xlu0 %v35, 126
  %v164 = vpop.permute.xlu0 %163
  %vm165 = vcmp.ge.s32.totalorder %v49, 0
  %vm166 = vcmp.lt.s32.totalorder %v49, 62
  %vm167 = vmand %vm165, %vm166
  %v168 = vsel %vm167, %v158, 0.0
  %v169 = vsel %vm167, %v160, 0.0
  %v170 = vsel %vm167, %v162, 0.0
  %v171 = vsel %vm167, %v164, 0.0
  %s172 = scalar_lea.vmem %s1, 64
  %v173 = vld [vmem:[%s172] sm:$0xff]
  %v174 = vld [vmem:[%s172 + $0x8] sm:$0xff]
  %v175 = vld [vmem:[%s172 + $0x10] sm:$0xff]
  %v176 = vld [vmem:[%s172 + $0x18] sm:$0xff]
  %v178 = vsel %vm74, %v173, 0
  %v181 = vsel %vm74, %v174, 0
  %v184 = vsel %vm74, %v175, 0
  %v187 = vsel %vm74, %v176, 0
  %189 = vmatpush.msra.mxu0 0.0
  %190 = vmatpush.msra.mxu0 0.0
  %191 = vmatpush.msra.mxu0 0.0
  %192 = vmatpush.msra.mxu0 0.0
  %193 = vmatpush.msra.mxu0 0.0
  %194 = vmatpush.msra.mxu0 0.0
  %195 = vmatpush.msra.mxu0 0.0
  %196 = vmatpush.msra.mxu0 0.0
  %197 = vmatpush.msra.mxu0 0.0
  %198 = vmatpush.msra.mxu0 0.0
  %199 = vmatpush.msra.mxu0 0.0
  %200 = vmatpush.msra.mxu0 0.0
  %201 = vmatpush.msra.mxu0 %v171
  %202 = vmatpush.msra.mxu0 %v170
  %203 = vmatpush.msra.mxu0 %v169
  %204 = vmatpush.msra.mxu0 %v168
  %205 = vmatmul.f32.gmra.mxu0 %v178
  %v206 = vpop.f32.mrf.mxu0
  %v207 = vadd.f32 0.0, %v206
  %208 = vmatmul.f32.gmra.mxu0 %v181
  %v209 = vpop.f32.mrf.mxu0
  %v210 = vadd.f32 0.0, %v209
  %211 = vmatmul.f32.gmra.mxu0 %v184
  %v212 = vpop.f32.mrf.mxu0
  %v213 = vadd.f32 0.0, %v212
  %214 = vmatmul.f32.gmra.mxu0 %v187
  %v215 = vpop.f32.mrf.mxu0
  %v216 = vadd.f32 0.0, %v215
  %217 = vdwg.mxu0
  %v218 = vadd.f32 %v146, %v207
  %v219 = vadd.f32 %v149, %v210
  %v220 = vadd.f32 %v152, %v213
  %v221 = vadd.f32 %v155, %v216
  %v222 = vld [vmem:[%s2] sm:$0xff]
  %v223 = vld [vmem:[%s2 + $0x8] sm:$0xff]
  %v224 = vld [vmem:[%s2 + $0x10] sm:$0xff]
  %v225 = vld [vmem:[%s2 + $0x18] sm:$0xff]
  %227 = vset.pattern.permute.xlu0 0
  %228 = vperm.xlu0 %227, %v222
  %v229 = vpop.permute.xlu0 %228
  %232 = vset.pattern.permute.xlu0 0
  %233 = vperm.xlu0 %232, %v223
  %v234 = vpop.permute.xlu0 %233
  %237 = vset.pattern.permute.xlu0 0
  %238 = vperm.xlu0 %237, %v224
  %v239 = vpop.permute.xlu0 %238
  %242 = vset.pattern.permute.xlu0 0
  %243 = vperm.xlu0 %242, %v225
  %v244 = vpop.permute.xlu0 %243
  %v246 = vadd.f32 %v218, %v229
  %v247 = vadd.f32 %v219, %v234
  %v248 = vadd.f32 %v220, %v239
  %v249 = vadd.f32 %v221, %v244
  %vm250 = vcmp.ge.f32.partialorder %v246, 0.0
  %vm251 = vcmp.ge.f32.partialorder %v247, 0.0
  %vm252 = vcmp.ge.f32.partialorder %v248, 0.0
  %vm253 = vcmp.ge.f32.partialorder %v249, 0.0
  %v254 = vmul.f32 %v246, 0.2
  %v255 = vmul.f32 %v247, 0.2
  %v256 = vmul.f32 %v248, 0.2
  %v257 = vmul.f32 %v249, 0.2
  %v258 = vsel %vm250, %v246, %v254
  %v259 = vsel %vm251, %v247, %v255
  %v260 = vsel %vm252, %v248, %v256
  %v261 = vsel %vm253, %v249, %v257
  %v262 = vld [vmem:[%s3] sm:$0xff]
  %v263 = vld [vmem:[%s3 + $0x8] sm:$0xff]
  %v264 = vld [vmem:[%s3 + $0x10] sm:$0xff]
  %v265 = vld [vmem:[%s3 + $0x18] sm:$0xff]
  %v266 = vld [vmem:[%s4] sm:$0xff]
  %v267 = vld [vmem:[%s4 + $0x8] sm:$0xff]
  %v268 = vld [vmem:[%s4 + $0x10] sm:$0xff]
  %v269 = vld [vmem:[%s4 + $0x18] sm:$0xff]
  %271 = vset.pattern.permute.xlu0 0
  %272 = vperm.xlu0 %271, %v266
  %v273 = vpop.permute.xlu0 %272
  %276 = vset.pattern.permute.xlu0 0
  %277 = vperm.xlu0 %276, %v267
  %v278 = vpop.permute.xlu0 %277
  %281 = vset.pattern.permute.xlu0 0
  %282 = vperm.xlu0 %281, %v268
  %v283 = vpop.permute.xlu0 %282
  %286 = vset.pattern.permute.xlu0 0
  %287 = vperm.xlu0 %286, %v269
  %v288 = vpop.permute.xlu0 %287
  %v291 = vsel %vm74, %v262, 0
  %v294 = vsel %vm74, %v263, 0
  %v297 = vsel %vm74, %v264, 0
  %v300 = vsel %vm74, %v265, 0
  %302 = vmatpush.msra.mxu0 0.0
  %303 = vmatpush.msra.mxu0 0.0
  %304 = vmatpush.msra.mxu0 0.0
  %305 = vmatpush.msra.mxu0 0.0
  %306 = vmatpush.msra.mxu0 0.0
  %307 = vmatpush.msra.mxu0 0.0
  %308 = vmatpush.msra.mxu0 0.0
  %309 = vmatpush.msra.mxu0 0.0
  %310 = vmatpush.msra.mxu0 0.0
  %311 = vmatpush.msra.mxu0 0.0
  %312 = vmatpush.msra.mxu0 0.0
  %313 = vmatpush.msra.mxu0 0.0
  %314 = vmatpush.msra.mxu0 %v261
  %315 = vmatpush.msra.mxu0 %v260
  %316 = vmatpush.msra.mxu0 %v259
  %317 = vmatpush.msra.mxu0 %v258
  %318 = vmatmul.f32.gmra.mxu0 %v291
  %v319 = vpop.f32.mrf.mxu0
  %v320 = vadd.f32 %v273, %v319
  %321 = vmatmul.f32.gmra.mxu0 %v294
  %v322 = vpop.f32.mrf.mxu0
  %v323 = vadd.f32 %v278, %v322
  %324 = vmatmul.f32.gmra.mxu0 %v297
  %v325 = vpop.f32.mrf.mxu0
  %v326 = vadd.f32 %v283, %v325
  %327 = vmatmul.f32.gmra.mxu0 %v300
  %v328 = vpop.f32.mrf.mxu0
  %v329 = vadd.f32 %v288, %v328
  %330 = vdwg.mxu0
  %331 = vst [vmem:[%s5] sm:$0xff] %v320
  %332 = vst [vmem:[%s5 + $0x8] sm:$0xff] %v323
  %333 = vst [vmem:[%s5 + $0x10] sm:$0xff] %v326
  %334 = vst [vmem:[%s5 + $0x18] sm:$0xff] %v329
  // Predicated region
  $region22: #{dilated_unit_forward.1} parent=0 // pred_check
    _
  $region23: #{dilated_unit_forward.1} parent=0 // pred_check_branch
    %336 = sbr.rel (0) target = $region25
  $region24: #{dilated_unit_forward.1} parent=0 // pred_region
    _
  $region25: #{dilated_unit_forward.1} parent=0 // pred_fallthru
    _
  // Predicated region
  $region26: #{dilated_unit_forward.1} parent=0 // pred_check
    _
  $region27: #{dilated_unit_forward.1} parent=0 // pred_check_branch
    %338 = sbr.rel (0) target = $region29
  $region28: #{dilated_unit_forward.1} parent=0 // pred_region
    _
  $region29: #{dilated_unit_forward.1} parent=0 // pred_fallthru
    _

</llo_original>
